<compile_context>
chip_gen: v7x
topology: tpu7x:2x2x1
jax: 0.10.0
libtpu: 0.0.40
codegen_flags: <defaults>
</compile_context>

<pallas_src>
import functools

import jax
import jax.numpy as jnp
from jax.experimental import pallas as pl
from jax.experimental.pallas import tpu as pltpu


HIDDEN_SIZES = (8, 16, 8)


def _round_up(x: int, m: int) -> int:
    return ((x + m - 1) // m) * m


def policy_net_kernel(x_ref, wb1_ref, wb2_ref, wb3_ref, wb4_ref, o_ref):
    """x_ref: (state_dims, TILE_B); wbN_ref: (out_f, in_f + 1) = [W | b];
    o_ref: (action_dims, TILE_B)."""

    def dense(wb_ref, x, relu):
        out_f, cols = wb_ref.shape
        in_f = cols - 1
        tile_b = x.shape[1]
        wb = wb_ref[...]                                    # tiny resident slab
        # Accumulator initialized with the bias, broadcast across lanes (batch).
        acc = jnp.broadcast_to(wb[:, in_f:in_f + 1], (out_f, tile_b))
        # Unrolled VPU broadcast-FMA over the (<=16) input features.  The weight
        # column splats along lanes, the activation row splats along sublanes;
        # both co-issue with the VALU mul/add, so the VALU is the only hot slot.
        for i in range(in_f):
            acc = acc + wb[:, i:i + 1] * x[i:i + 1, :]
        if relu:
            acc = jnp.maximum(acc, 0.0)
        return acc

    h = dense(wb1_ref, x_ref[...], relu=True)   # state_dims -> 8
    h = dense(wb2_ref, h, relu=True)            # 8 -> 16
    h = dense(wb3_ref, h, relu=True)            # 16 -> 8
    h = dense(wb4_ref, h, relu=False)           # 8 -> action_dims
    o_ref[...] = h.astype(o_ref.dtype)


@functools.partial(jax.jit, static_argnames=("tile_b",))
def policy_net_forward(x, wb_params, *, tile_b: int = 512):
    """x: (B, state_dims) or (state_dims,) f32; wb_params: 4 slabs (out_f, in_f+1)=[W|b].

    Returns (B, action_dims) (or (action_dims,) for 1-D input), matching
    PyTorch PolicyNet.forward.
    """
    squeeze = x.ndim == 1
    if squeeze:
        x = x[None, :]
    B, state_dims = x.shape
    action_dims = wb_params[-1].shape[0]

    # Lane-dense layout: batch on the last (lane) axis.
    xt = x.T.astype(jnp.float32)                 # (state_dims, B)

    # Batch tile: multiple of 128 (lane width), capped by requested tile_b.
    eff_tile = min(max(tile_b, 128), _round_up(B, 128))
    eff_tile = _round_up(eff_tile, 128)
    b_pad = _round_up(B, eff_tile)
    if b_pad != B:
        xt = jnp.pad(xt, ((0, 0), (0, b_pad - B)))

    grid = (b_pad // eff_tile,)

    in_specs = [pl.BlockSpec((state_dims, eff_tile), lambda i: (0, i))]
    for wb in wb_params:
        # Resident weights: constant block index -> DMA'd once, not per tile.
        in_specs.append(pl.BlockSpec(wb.shape, lambda i: (0, 0)))
    out_specs = pl.BlockSpec((action_dims, eff_tile), lambda i: (0, i))

    yt = pl.pallas_call(
        policy_net_kernel,
        out_shape=jax.ShapeDtypeStruct((action_dims, b_pad), jnp.float32),
        grid=grid,
        in_specs=in_specs,
        out_specs=out_specs,
        compiler_params=pltpu.CompilerParams(
            dimension_semantics=("parallel",)),
    )(xt, *wb_params)

    out = yt[:, :B].T                            # back to (B, action_dims)
    return out[0] if squeeze else out


def init_params(key, state_dims, action_dims):
    """PyTorch-like nn.Linear init: U(-1/sqrt(fan_in), 1/sqrt(fan_in)).

    Returns 4 packed slabs of shape (out_features, in_features + 1) = [W | b],
    with W stored exactly like PyTorch (out, in)."""
    sizes = [(state_dims, HIDDEN_SIZES[0]),
             (HIDDEN_SIZES[0], HIDDEN_SIZES[1]),
             (HIDDEN_SIZES[1], HIDDEN_SIZES[2]),
             (HIDDEN_SIZES[2], action_dims)]
    params = []
    for fan_in, fan_out in sizes:
        key, kw, kb = jax.random.split(key, 3)
        bound = 1.0 / float(fan_in) ** 0.5
        w = jax.random.uniform(kw, (fan_out, fan_in), jnp.float32, -bound, bound)
        b = jax.random.uniform(kb, (fan_out,), jnp.float32, -bound, bound)
        params.append(jnp.concatenate([w, b[:, None]], axis=1))
    return params


def reference_forward(x, wb_params):
    squeeze = x.ndim == 1
    h = x[None, :] if squeeze else x
    for idx, wb in enumerate(wb_params):
        w, b = wb[:, :-1], wb[:, -1]
        h = h @ w.T + b
        if idx < len(wb_params) - 1:
            h = jnp.maximum(h, 0.0)
    return h[0] if squeeze else h


if __name__ == "__main__":
    state_dims = 4
    action_dims = 3

    key = jax.random.PRNGKey(0)
    key, kx0, kx1, kx2 = jax.random.split(key, 4)
    params = init_params(key, state_dims, action_dims)

    # Single state vector, as in the PyTorch docstring: shape (state_dims,).
    x0 = jax.random.normal(kx0, (state_dims,), jnp.float32)
    out0 = jax.block_until_ready(policy_net_forward(x0, params))
    ref0 = reference_forward(x0, params)
    assert out0.shape == (action_dims,)
    assert jnp.allclose(out0, ref0, atol=1e-5, rtol=1e-5)

    # Small batch (single tile).
    x1 = jax.random.normal(kx1, (2, state_dims), jnp.float32)
    out1 = jax.block_until_ready(policy_net_forward(x1, params))
    ref1 = reference_forward(x1, params)
    assert out1.shape == (2, action_dims)
    assert jnp.allclose(out1, ref1, atol=1e-5, rtol=1e-5)

    # Larger, non-multiple batch to exercise the multi-tile grid + tail padding.
    x2 = jax.random.normal(kx2, (300, state_dims), jnp.float32)
    out2 = jax.block_until_ready(policy_net_forward(x2, params, tile_b=128))
    ref2 = reference_forward(x2, params)
    assert out2.shape == (300, action_dims)
    assert jnp.allclose(out2, ref2, atol=1e-5, rtol=1e-5)

    print("KERNEL_OK")
</pallas_src>

<mosaic_0001>
module attributes {stable_mosaic.version = 11 : i64} {
  func.func @policy_net_kernel(%arg0: i32, %arg1: memref<4x128xf32, #tpu.memory_space<vmem>>, %arg2: memref<8x5xf32, #tpu.memory_space<vmem>>, %arg3: memref<16x9xf32, #tpu.memory_space<vmem>>, %arg4: memref<8x17xf32, #tpu.memory_space<vmem>>, %arg5: memref<3x9xf32, #tpu.memory_space<vmem>>, %arg6: memref<3x128xf32, #tpu.memory_space<vmem>>) attributes {dimension_semantics = [#tpu.dimension_semantics<parallel>], iteration_bounds = array<i64: 1>, scalar_prefetch = 0 : i64, scratch_operands = 0 : i64, tpu.core_type = #tpu.core_type<tc>, window_params = [{transform_indices = @transform_0, window_bounds = array<i64: 4, 128>}, {pipeline_mode = #tpu.pipeline_mode<synchronous>, transform_indices = @transform_1, window_bounds = array<i64: 8, 5>}, {pipeline_mode = #tpu.pipeline_mode<synchronous>, transform_indices = @transform_2, window_bounds = array<i64: 16, 9>}, {pipeline_mode = #tpu.pipeline_mode<synchronous>, transform_indices = @transform_3, window_bounds = array<i64: 8, 17>}, {pipeline_mode = #tpu.pipeline_mode<synchronous>, transform_indices = @transform_4, window_bounds = array<i64: 3, 9>}, {transform_indices = @transform_5, window_bounds = array<i64: 3, 128>}]} {
    %c0 = arith.constant 0 : index
    %c0_0 = arith.constant 0 : index
    %0 = vector.load %arg1[%c0, %c0_0] : memref<4x128xf32, #tpu.memory_space<vmem>>, vector<4x128xf32>
    %c0_1 = arith.constant 0 : index
    %c0_2 = arith.constant 0 : index
    %1 = vector.load %arg2[%c0_1, %c0_2] : memref<8x5xf32, #tpu.memory_space<vmem>>, vector<8x5xf32>
    %2 = vector.extract_strided_slice %1 {offsets = [0, 4], sizes = [8, 1], strides = [1, 1]} : vector<8x5xf32> to vector<8x1xf32>
    %3 = vector.shape_cast %2 : vector<8x1xf32> to vector<8x1xf32>
    %4 = vector.broadcast %3 : vector<8x1xf32> to vector<8x128xf32>
    %5 = vector.extract_strided_slice %1 {offsets = [0, 0], sizes = [8, 1], strides = [1, 1]} : vector<8x5xf32> to vector<8x1xf32>
    %6 = vector.extract_strided_slice %0 {offsets = [0, 0], sizes = [1, 128], strides = [1, 1]} : vector<4x128xf32> to vector<1x128xf32>
    %7 = vector.broadcast %5 : vector<8x1xf32> to vector<8x128xf32>
    %8 = vector.broadcast %6 : vector<1x128xf32> to vector<8x128xf32>
    %9 = arith.mulf %7, %8 : vector<8x128xf32>
    %10 = arith.addf %4, %9 : vector<8x128xf32>
    %11 = vector.extract_strided_slice %1 {offsets = [0, 1], sizes = [8, 1], strides = [1, 1]} : vector<8x5xf32> to vector<8x1xf32>
    %12 = vector.extract_strided_slice %0 {offsets = [1, 0], sizes = [1, 128], strides = [1, 1]} : vector<4x128xf32> to vector<1x128xf32>
    %13 = vector.broadcast %11 : vector<8x1xf32> to vector<8x128xf32>
    %14 = vector.broadcast %12 : vector<1x128xf32> to vector<8x128xf32>
    %15 = arith.mulf %13, %14 : vector<8x128xf32>
    %16 = arith.addf %10, %15 : vector<8x128xf32>
    %17 = vector.extract_strided_slice %1 {offsets = [0, 2], sizes = [8, 1], strides = [1, 1]} : vector<8x5xf32> to vector<8x1xf32>
    %18 = vector.extract_strided_slice %0 {offsets = [2, 0], sizes = [1, 128], strides = [1, 1]} : vector<4x128xf32> to vector<1x128xf32>
    %19 = vector.broadcast %17 : vector<8x1xf32> to vector<8x128xf32>
    %20 = vector.broadcast %18 : vector<1x128xf32> to vector<8x128xf32>
    %21 = arith.mulf %19, %20 : vector<8x128xf32>
    %22 = arith.addf %16, %21 : vector<8x128xf32>
    %23 = vector.extract_strided_slice %1 {offsets = [0, 3], sizes = [8, 1], strides = [1, 1]} : vector<8x5xf32> to vector<8x1xf32>
    %24 = vector.extract_strided_slice %0 {offsets = [3, 0], sizes = [1, 128], strides = [1, 1]} : vector<4x128xf32> to vector<1x128xf32>
    %25 = vector.broadcast %23 : vector<8x1xf32> to vector<8x128xf32>
    %26 = vector.broadcast %24 : vector<1x128xf32> to vector<8x128xf32>
    %27 = arith.mulf %25, %26 : vector<8x128xf32>
    %28 = arith.addf %22, %27 : vector<8x128xf32>
    %cst = arith.constant 0.000000e+00 : f32
    %29 = vector.broadcast %cst : f32 to vector<8x128xf32>
    %30 = arith.maximumf %28, %29 : vector<8x128xf32>
    %c0_3 = arith.constant 0 : index
    %c0_4 = arith.constant 0 : index
    %31 = vector.load %arg3[%c0_3, %c0_4] : memref<16x9xf32, #tpu.memory_space<vmem>>, vector<16x9xf32>
    %32 = vector.extract_strided_slice %31 {offsets = [0, 8], sizes = [16, 1], strides = [1, 1]} : vector<16x9xf32> to vector<16x1xf32>
    %33 = vector.shape_cast %32 : vector<16x1xf32> to vector<16x1xf32>
    %34 = vector.broadcast %33 : vector<16x1xf32> to vector<16x128xf32>
    %35 = vector.extract_strided_slice %31 {offsets = [0, 0], sizes = [16, 1], strides = [1, 1]} : vector<16x9xf32> to vector<16x1xf32>
    %36 = vector.extract_strided_slice %30 {offsets = [0, 0], sizes = [1, 128], strides = [1, 1]} : vector<8x128xf32> to vector<1x128xf32>
    %37 = vector.broadcast %35 : vector<16x1xf32> to vector<16x128xf32>
    %38 = vector.broadcast %36 : vector<1x128xf32> to vector<16x128xf32>
    %39 = arith.mulf %37, %38 : vector<16x128xf32>
    %40 = arith.addf %34, %39 : vector<16x128xf32>
    %41 = vector.extract_strided_slice %31 {offsets = [0, 1], sizes = [16, 1], strides = [1, 1]} : vector<16x9xf32> to vector<16x1xf32>
    %42 = vector.extract_strided_slice %30 {offsets = [1, 0], sizes = [1, 128], strides = [1, 1]} : vector<8x128xf32> to vector<1x128xf32>
    %43 = vector.broadcast %41 : vector<16x1xf32> to vector<16x128xf32>
    %44 = vector.broadcast %42 : vector<1x128xf32> to vector<16x128xf32>
    %45 = arith.mulf %43, %44 : vector<16x128xf32>
    %46 = arith.addf %40, %45 : vector<16x128xf32>
    %47 = vector.extract_strided_slice %31 {offsets = [0, 2], sizes = [16, 1], strides = [1, 1]} : vector<16x9xf32> to vector<16x1xf32>
    %48 = vector.extract_strided_slice %30 {offsets = [2, 0], sizes = [1, 128], strides = [1, 1]} : vector<8x128xf32> to vector<1x128xf32>
    %49 = vector.broadcast %47 : vector<16x1xf32> to vector<16x128xf32>
    %50 = vector.broadcast %48 : vector<1x128xf32> to vector<16x128xf32>
    %51 = arith.mulf %49, %50 : vector<16x128xf32>
    %52 = arith.addf %46, %51 : vector<16x128xf32>
    %53 = vector.extract_strided_slice %31 {offsets = [0, 3], sizes = [16, 1], strides = [1, 1]} : vector<16x9xf32> to vector<16x1xf32>
    %54 = vector.extract_strided_slice %30 {offsets = [3, 0], sizes = [1, 128], strides = [1, 1]} : vector<8x128xf32> to vector<1x128xf32>
    %55 = vector.broadcast %53 : vector<16x1xf32> to vector<16x128xf32>
    %56 = vector.broadcast %54 : vector<1x128xf32> to vector<16x128xf32>
    %57 = arith.mulf %55, %56 : vector<16x128xf32>
    %58 = arith.addf %52, %57 : vector<16x128xf32>
    %59 = vector.extract_strided_slice %31 {offsets = [0, 4], sizes = [16, 1], strides = [1, 1]} : vector<16x9xf32> to vector<16x1xf32>
    %60 = vector.extract_strided_slice %30 {offsets = [4, 0], sizes = [1, 128], strides = [1, 1]} : vector<8x128xf32> to vector<1x128xf32>
    %61 = vector.broadcast %59 : vector<16x1xf32> to vector<16x128xf32>
    %62 = vector.broadcast %60 : vector<1x128xf32> to vector<16x128xf32>
    %63 = arith.mulf %61, %62 : vector<16x128xf32>
    %64 = arith.addf %58, %63 : vector<16x128xf32>
    %65 = vector.extract_strided_slice %31 {offsets = [0, 5], sizes = [16, 1], strides = [1, 1]} : vector<16x9xf32> to vector<16x1xf32>
    %66 = vector.extract_strided_slice %30 {offsets = [5, 0], sizes = [1, 128], strides = [1, 1]} : vector<8x128xf32> to vector<1x128xf32>
    %67 = vector.broadcast %65 : vector<16x1xf32> to vector<16x128xf32>
    %68 = vector.broadcast %66 : vector<1x128xf32> to vector<16x128xf32>
    %69 = arith.mulf %67, %68 : vector<16x128xf32>
    %70 = arith.addf %64, %69 : vector<16x128xf32>
    %71 = vector.extract_strided_slice %31 {offsets = [0, 6], sizes = [16, 1], strides = [1, 1]} : vector<16x9xf32> to vector<16x1xf32>
    %72 = vector.extract_strided_slice %30 {offsets = [6, 0], sizes = [1, 128], strides = [1, 1]} : vector<8x128xf32> to vector<1x128xf32>
    %73 = vector.broadcast %71 : vector<16x1xf32> to vector<16x128xf32>
    %74 = vector.broadcast %72 : vector<1x128xf32> to vector<16x128xf32>
    %75 = arith.mulf %73, %74 : vector<16x128xf32>
    %76 = arith.addf %70, %75 : vector<16x128xf32>
    %77 = vector.extract_strided_slice %31 {offsets = [0, 7], sizes = [16, 1], strides = [1, 1]} : vector<16x9xf32> to vector<16x1xf32>
    %78 = vector.extract_strided_slice %30 {offsets = [7, 0], sizes = [1, 128], strides = [1, 1]} : vector<8x128xf32> to vector<1x128xf32>
    %79 = vector.broadcast %77 : vector<16x1xf32> to vector<16x128xf32>
    %80 = vector.broadcast %78 : vector<1x128xf32> to vector<16x128xf32>
    %81 = arith.mulf %79, %80 : vector<16x128xf32>
    %82 = arith.addf %76, %81 : vector<16x128xf32>
    %cst_5 = arith.constant 0.000000e+00 : f32
    %83 = vector.broadcast %cst_5 : f32 to vector<16x128xf32>
    %84 = arith.maximumf %82, %83 : vector<16x128xf32>
    %c0_6 = arith.constant 0 : index
    %c0_7 = arith.constant 0 : index
    %85 = vector.load %arg4[%c0_6, %c0_7] : memref<8x17xf32, #tpu.memory_space<vmem>>, vector<8x17xf32>
    %86 = vector.extract_strided_slice %85 {offsets = [0, 16], sizes = [8, 1], strides = [1, 1]} : vector<8x17xf32> to vector<8x1xf32>
    %87 = vector.shape_cast %86 : vector<8x1xf32> to vector<8x1xf32>
    %88 = vector.broadcast %87 : vector<8x1xf32> to vector<8x128xf32>
    %89 = vector.extract_strided_slice %85 {offsets = [0, 0], sizes = [8, 1], strides = [1, 1]} : vector<8x17xf32> to vector<8x1xf32>
    %90 = vector.extract_strided_slice %84 {offsets = [0, 0], sizes = [1, 128], strides = [1, 1]} : vector<16x128xf32> to vector<1x128xf32>
    %91 = vector.broadcast %89 : vector<8x1xf32> to vector<8x128xf32>
    %92 = vector.broadcast %90 : vector<1x128xf32> to vector<8x128xf32>
    %93 = arith.mulf %91, %92 : vector<8x128xf32>
    %94 = arith.addf %88, %93 : vector<8x128xf32>
    %95 = vector.extract_strided_slice %85 {offsets = [0, 1], sizes = [8, 1], strides = [1, 1]} : vector<8x17xf32> to vector<8x1xf32>
    %96 = vector.extract_strided_slice %84 {offsets = [1, 0], sizes = [1, 128], strides = [1, 1]} : vector<16x128xf32> to vector<1x128xf32>
    %97 = vector.broadcast %95 : vector<8x1xf32> to vector<8x128xf32>
    %98 = vector.broadcast %96 : vector<1x128xf32> to vector<8x128xf32>
    %99 = arith.mulf %97, %98 : vector<8x128xf32>
    %100 = arith.addf %94, %99 : vector<8x128xf32>
    %101 = vector.extract_strided_slice %85 {offsets = [0, 2], sizes = [8, 1], strides = [1, 1]} : vector<8x17xf32> to vector<8x1xf32>
    %102 = vector.extract_strided_slice %84 {offsets = [2, 0], sizes = [1, 128], strides = [1, 1]} : vector<16x128xf32> to vector<1x128xf32>
    %103 = vector.broadcast %101 : vector<8x1xf32> to vector<8x128xf32>
    %104 = vector.broadcast %102 : vector<1x128xf32> to vector<8x128xf32>
    %105 = arith.mulf %103, %104 : vector<8x128xf32>
    %106 = arith.addf %100, %105 : vector<8x128xf32>
    %107 = vector.extract_strided_slice %85 {offsets = [0, 3], sizes = [8, 1], strides = [1, 1]} : vector<8x17xf32> to vector<8x1xf32>
    %108 = vector.extract_strided_slice %84 {offsets = [3, 0], sizes = [1, 128], strides = [1, 1]} : vector<16x128xf32> to vector<1x128xf32>
    %109 = vector.broadcast %107 : vector<8x1xf32> to vector<8x128xf32>
    %110 = vector.broadcast %108 : vector<1x128xf32> to vector<8x128xf32>
    %111 = arith.mulf %109, %110 : vector<8x128xf32>
    %112 = arith.addf %106, %111 : vector<8x128xf32>
    %113 = vector.extract_strided_slice %85 {offsets = [0, 4], sizes = [8, 1], strides = [1, 1]} : vector<8x17xf32> to vector<8x1xf32>
    %114 = vector.extract_strided_slice %84 {offsets = [4, 0], sizes = [1, 128], strides = [1, 1]} : vector<16x128xf32> to vector<1x128xf32>
    %115 = vector.broadcast %113 : vector<8x1xf32> to vector<8x128xf32>
    %116 = vector.broadcast %114 : vector<1x128xf32> to vector<8x128xf32>
    %117 = arith.mulf %115, %116 : vector<8x128xf32>
    %118 = arith.addf %112, %117 : vector<8x128xf32>
    %119 = vector.extract_strided_slice %85 {offsets = [0, 5], sizes = [8, 1], strides = [1, 1]} : vector<8x17xf32> to vector<8x1xf32>
    %120 = vector.extract_strided_slice %84 {offsets = [5, 0], sizes = [1, 128], strides = [1, 1]} : vector<16x128xf32> to vector<1x128xf32>
    %121 = vector.broadcast %119 : vector<8x1xf32> to vector<8x128xf32>
    %122 = vector.broadcast %120 : vector<1x128xf32> to vector<8x128xf32>
    %123 = arith.mulf %121, %122 : vector<8x128xf32>
    %124 = arith.addf %118, %123 : vector<8x128xf32>
    %125 = vector.extract_strided_slice %85 {offsets = [0, 6], sizes = [8, 1], strides = [1, 1]} : vector<8x17xf32> to vector<8x1xf32>
    %126 = vector.extract_strided_slice %84 {offsets = [6, 0], sizes = [1, 128], strides = [1, 1]} : vector<16x128xf32> to vector<1x128xf32>
    %127 = vector.broadcast %125 : vector<8x1xf32> to vector<8x128xf32>
    %128 = vector.broadcast %126 : vector<1x128xf32> to vector<8x128xf32>
    %129 = arith.mulf %127, %128 : vector<8x128xf32>
    %130 = arith.addf %124, %129 : vector<8x128xf32>
    %131 = vector.extract_strided_slice %85 {offsets = [0, 7], sizes = [8, 1], strides = [1, 1]} : vector<8x17xf32> to vector<8x1xf32>
    %132 = vector.extract_strided_slice %84 {offsets = [7, 0], sizes = [1, 128], strides = [1, 1]} : vector<16x128xf32> to vector<1x128xf32>
    %133 = vector.broadcast %131 : vector<8x1xf32> to vector<8x128xf32>
    %134 = vector.broadcast %132 : vector<1x128xf32> to vector<8x128xf32>
    %135 = arith.mulf %133, %134 : vector<8x128xf32>
    %136 = arith.addf %130, %135 : vector<8x128xf32>
    %137 = vector.extract_strided_slice %85 {offsets = [0, 8], sizes = [8, 1], strides = [1, 1]} : vector<8x17xf32> to vector<8x1xf32>
    %138 = vector.extract_strided_slice %84 {offsets = [8, 0], sizes = [1, 128], strides = [1, 1]} : vector<16x128xf32> to vector<1x128xf32>
    %139 = vector.broadcast %137 : vector<8x1xf32> to vector<8x128xf32>
    %140 = vector.broadcast %138 : vector<1x128xf32> to vector<8x128xf32>
    %141 = arith.mulf %139, %140 : vector<8x128xf32>
    %142 = arith.addf %136, %141 : vector<8x128xf32>
    %143 = vector.extract_strided_slice %85 {offsets = [0, 9], sizes = [8, 1], strides = [1, 1]} : vector<8x17xf32> to vector<8x1xf32>
    %144 = vector.extract_strided_slice %84 {offsets = [9, 0], sizes = [1, 128], strides = [1, 1]} : vector<16x128xf32> to vector<1x128xf32>
    %145 = vector.broadcast %143 : vector<8x1xf32> to vector<8x128xf32>
    %146 = vector.broadcast %144 : vector<1x128xf32> to vector<8x128xf32>
    %147 = arith.mulf %145, %146 : vector<8x128xf32>
    %148 = arith.addf %142, %147 : vector<8x128xf32>
    %149 = vector.extract_strided_slice %85 {offsets = [0, 10], sizes = [8, 1], strides = [1, 1]} : vector<8x17xf32> to vector<8x1xf32>
    %150 = vector.extract_strided_slice %84 {offsets = [10, 0], sizes = [1, 128], strides = [1, 1]} : vector<16x128xf32> to vector<1x128xf32>
    %151 = vector.broadcast %149 : vector<8x1xf32> to vector<8x128xf32>
    %152 = vector.broadcast %150 : vector<1x128xf32> to vector<8x128xf32>
    %153 = arith.mulf %151, %152 : vector<8x128xf32>
    %154 = arith.addf %148, %153 : vector<8x128xf32>
    %155 = vector.extract_strided_slice %85 {offsets = [0, 11], sizes = [8, 1], strides = [1, 1]} : vector<8x17xf32> to vector<8x1xf32>
    %156 = vector.extract_strided_slice %84 {offsets = [11, 0], sizes = [1, 128], strides = [1, 1]} : vector<16x128xf32> to vector<1x128xf32>
    %157 = vector.broadcast %155 : vector<8x1xf32> to vector<8x128xf32>
    %158 = vector.broadcast %156 : vector<1x128xf32> to vector<8x128xf32>
    %159 = arith.mulf %157, %158 : vector<8x128xf32>
    %160 = arith.addf %154, %159 : vector<8x128xf32>
    %161 = vector.extract_strided_slice %85 {offsets = [0, 12], sizes = [8, 1], strides = [1, 1]} : vector<8x17xf32> to vector<8x1xf32>
    %162 = vector.extract_strided_slice %84 {offsets = [12, 0], sizes = [1, 128], strides = [1, 1]} : vector<16x128xf32> to vector<1x128xf32>
    %163 = vector.broadcast %161 : vector<8x1xf32> to vector<8x128xf32>
    %164 = vector.broadcast %162 : vector<1x128xf32> to vector<8x128xf32>
    %165 = arith.mulf %163, %164 : vector<8x128xf32>
    %166 = arith.addf %160, %165 : vector<8x128xf32>
    %167 = vector.extract_strided_slice %85 {offsets = [0, 13], sizes = [8, 1], strides = [1, 1]} : vector<8x17xf32> to vector<8x1xf32>
    %168 = vector.extract_strided_slice %84 {offsets = [13, 0], sizes = [1, 128], strides = [1, 1]} : vector<16x128xf32> to vector<1x128xf32>
    %169 = vector.broadcast %167 : vector<8x1xf32> to vector<8x128xf32>
    %170 = vector.broadcast %168 : vector<1x128xf32> to vector<8x128xf32>
    %171 = arith.mulf %169, %170 : vector<8x128xf32>
    %172 = arith.addf %166, %171 : vector<8x128xf32>
    %173 = vector.extract_strided_slice %85 {offsets = [0, 14], sizes = [8, 1], strides = [1, 1]} : vector<8x17xf32> to vector<8x1xf32>
    %174 = vector.extract_strided_slice %84 {offsets = [14, 0], sizes = [1, 128], strides = [1, 1]} : vector<16x128xf32> to vector<1x128xf32>
    %175 = vector.broadcast %173 : vector<8x1xf32> to vector<8x128xf32>
    %176 = vector.broadcast %174 : vector<1x128xf32> to vector<8x128xf32>
    %177 = arith.mulf %175, %176 : vector<8x128xf32>
    %178 = arith.addf %172, %177 : vector<8x128xf32>
    %179 = vector.extract_strided_slice %85 {offsets = [0, 15], sizes = [8, 1], strides = [1, 1]} : vector<8x17xf32> to vector<8x1xf32>
    %180 = vector.extract_strided_slice %84 {offsets = [15, 0], sizes = [1, 128], strides = [1, 1]} : vector<16x128xf32> to vector<1x128xf32>
    %181 = vector.broadcast %179 : vector<8x1xf32> to vector<8x128xf32>
    %182 = vector.broadcast %180 : vector<1x128xf32> to vector<8x128xf32>
    %183 = arith.mulf %181, %182 : vector<8x128xf32>
    %184 = arith.addf %178, %183 : vector<8x128xf32>
    %cst_8 = arith.constant 0.000000e+00 : f32
    %185 = vector.broadcast %cst_8 : f32 to vector<8x128xf32>
    %186 = arith.maximumf %184, %185 : vector<8x128xf32>
    %c0_9 = arith.constant 0 : index
    %c0_10 = arith.constant 0 : index
    %187 = vector.load %arg5[%c0_9, %c0_10] : memref<3x9xf32, #tpu.memory_space<vmem>>, vector<3x9xf32>
    %188 = vector.extract_strided_slice %187 {offsets = [0, 8], sizes = [3, 1], strides = [1, 1]} : vector<3x9xf32> to vector<3x1xf32>
    %189 = vector.shape_cast %188 : vector<3x1xf32> to vector<3x1xf32>
    %190 = vector.broadcast %189 : vector<3x1xf32> to vector<3x128xf32>
    %191 = vector.extract_strided_slice %187 {offsets = [0, 0], sizes = [3, 1], strides = [1, 1]} : vector<3x9xf32> to vector<3x1xf32>
    %192 = vector.extract_strided_slice %186 {offsets = [0, 0], sizes = [1, 128], strides = [1, 1]} : vector<8x128xf32> to vector<1x128xf32>
    %193 = vector.broadcast %191 : vector<3x1xf32> to vector<3x128xf32>
    %194 = vector.broadcast %192 : vector<1x128xf32> to vector<3x128xf32>
    %195 = arith.mulf %193, %194 : vector<3x128xf32>
    %196 = arith.addf %190, %195 : vector<3x128xf32>
    %197 = vector.extract_strided_slice %187 {offsets = [0, 1], sizes = [3, 1], strides = [1, 1]} : vector<3x9xf32> to vector<3x1xf32>
    %198 = vector.extract_strided_slice %186 {offsets = [1, 0], sizes = [1, 128], strides = [1, 1]} : vector<8x128xf32> to vector<1x128xf32>
    %199 = vector.broadcast %197 : vector<3x1xf32> to vector<3x128xf32>
    %200 = vector.broadcast %198 : vector<1x128xf32> to vector<3x128xf32>
    %201 = arith.mulf %199, %200 : vector<3x128xf32>
    %202 = arith.addf %196, %201 : vector<3x128xf32>
    %203 = vector.extract_strided_slice %187 {offsets = [0, 2], sizes = [3, 1], strides = [1, 1]} : vector<3x9xf32> to vector<3x1xf32>
    %204 = vector.extract_strided_slice %186 {offsets = [2, 0], sizes = [1, 128], strides = [1, 1]} : vector<8x128xf32> to vector<1x128xf32>
    %205 = vector.broadcast %203 : vector<3x1xf32> to vector<3x128xf32>
    %206 = vector.broadcast %204 : vector<1x128xf32> to vector<3x128xf32>
    %207 = arith.mulf %205, %206 : vector<3x128xf32>
    %208 = arith.addf %202, %207 : vector<3x128xf32>
    %209 = vector.extract_strided_slice %187 {offsets = [0, 3], sizes = [3, 1], strides = [1, 1]} : vector<3x9xf32> to vector<3x1xf32>
    %210 = vector.extract_strided_slice %186 {offsets = [3, 0], sizes = [1, 128], strides = [1, 1]} : vector<8x128xf32> to vector<1x128xf32>
    %211 = vector.broadcast %209 : vector<3x1xf32> to vector<3x128xf32>
    %212 = vector.broadcast %210 : vector<1x128xf32> to vector<3x128xf32>
    %213 = arith.mulf %211, %212 : vector<3x128xf32>
    %214 = arith.addf %208, %213 : vector<3x128xf32>
    %215 = vector.extract_strided_slice %187 {offsets = [0, 4], sizes = [3, 1], strides = [1, 1]} : vector<3x9xf32> to vector<3x1xf32>
    %216 = vector.extract_strided_slice %186 {offsets = [4, 0], sizes = [1, 128], strides = [1, 1]} : vector<8x128xf32> to vector<1x128xf32>
    %217 = vector.broadcast %215 : vector<3x1xf32> to vector<3x128xf32>
    %218 = vector.broadcast %216 : vector<1x128xf32> to vector<3x128xf32>
    %219 = arith.mulf %217, %218 : vector<3x128xf32>
    %220 = arith.addf %214, %219 : vector<3x128xf32>
    %221 = vector.extract_strided_slice %187 {offsets = [0, 5], sizes = [3, 1], strides = [1, 1]} : vector<3x9xf32> to vector<3x1xf32>
    %222 = vector.extract_strided_slice %186 {offsets = [5, 0], sizes = [1, 128], strides = [1, 1]} : vector<8x128xf32> to vector<1x128xf32>
    %223 = vector.broadcast %221 : vector<3x1xf32> to vector<3x128xf32>
    %224 = vector.broadcast %222 : vector<1x128xf32> to vector<3x128xf32>
    %225 = arith.mulf %223, %224 : vector<3x128xf32>
    %226 = arith.addf %220, %225 : vector<3x128xf32>
    %227 = vector.extract_strided_slice %187 {offsets = [0, 6], sizes = [3, 1], strides = [1, 1]} : vector<3x9xf32> to vector<3x1xf32>
    %228 = vector.extract_strided_slice %186 {offsets = [6, 0], sizes = [1, 128], strides = [1, 1]} : vector<8x128xf32> to vector<1x128xf32>
    %229 = vector.broadcast %227 : vector<3x1xf32> to vector<3x128xf32>
    %230 = vector.broadcast %228 : vector<1x128xf32> to vector<3x128xf32>
    %231 = arith.mulf %229, %230 : vector<3x128xf32>
    %232 = arith.addf %226, %231 : vector<3x128xf32>
    %233 = vector.extract_strided_slice %187 {offsets = [0, 7], sizes = [3, 1], strides = [1, 1]} : vector<3x9xf32> to vector<3x1xf32>
    %234 = vector.extract_strided_slice %186 {offsets = [7, 0], sizes = [1, 128], strides = [1, 1]} : vector<8x128xf32> to vector<1x128xf32>
    %235 = vector.broadcast %233 : vector<3x1xf32> to vector<3x128xf32>
    %236 = vector.broadcast %234 : vector<1x128xf32> to vector<3x128xf32>
    %237 = arith.mulf %235, %236 : vector<3x128xf32>
    %238 = arith.addf %232, %237 : vector<3x128xf32>
    %c0_11 = arith.constant 0 : index
    %c0_12 = arith.constant 0 : index
    %239 = vector.load %arg6[%c0_11, %c0_12] : memref<3x128xf32, #tpu.memory_space<vmem>>, vector<3x128xf32>
    tpu.vector_store %arg6[%c0_11, %c0_12], %238 {strides = array<i32>} : memref<3x128xf32, #tpu.memory_space<vmem>>, vector<3x128xf32>,
    return
  }
  func.func @transform_0(%arg0: i32) -> (i32, i32) {
    %c0_i32 = arith.constant 0 : i32
    %c0_i32_0 = arith.constant 0 : i32
    return %c0_i32, %arg0 : i32, i32
  }
  func.func @transform_1(%arg0: i32) -> (i32, i32) {
    %c0_i32 = arith.constant 0 : i32
    %c0_i32_0 = arith.constant 0 : i32
    %c0_i32_1 = arith.constant 0 : i32
    return %c0_i32, %c0_i32_0 : i32, i32
  }
  func.func @transform_2(%arg0: i32) -> (i32, i32) {
    %c0_i32 = arith.constant 0 : i32
    %c0_i32_0 = arith.constant 0 : i32
    %c0_i32_1 = arith.constant 0 : i32
    return %c0_i32, %c0_i32_0 : i32, i32
  }
  func.func @transform_3(%arg0: i32) -> (i32, i32) {
    %c0_i32 = arith.constant 0 : i32
    %c0_i32_0 = arith.constant 0 : i32
    %c0_i32_1 = arith.constant 0 : i32
    return %c0_i32, %c0_i32_0 : i32, i32
  }
  func.func @transform_4(%arg0: i32) -> (i32, i32) {
    %c0_i32 = arith.constant 0 : i32
    %c0_i32_0 = arith.constant 0 : i32
    %c0_i32_1 = arith.constant 0 : i32
    return %c0_i32, %c0_i32_0 : i32, i32
  }
  func.func @transform_5(%arg0: i32) -> (i32, i32) {
    %c0_i32 = arith.constant 0 : i32
    %c0_i32_0 = arith.constant 0 : i32
    return %c0_i32, %arg0 : i32, i32
  }
}

</mosaic_0001>

<llo_original>
// kernel: policy_net_forward.1
$region0: #{policy_net_forward.1}
  #allocation0 [shape = 'u32[]', space=smem, size = 0x4, offset = 0x4, fixed_abs, tag = 'smem constant byte address 0x4 - core index']
  #allocation1 [shape = 'u32[144,128]{1,0:T(1,128)}', space=vmem, size = 0x12000, scoped, tag = 'internal scratch']
  %s0 = inlined_call_operand.vmem [shape: f32[4,128], index: 0, kind: input, shape index: {}]
  %s1 = inlined_call_operand.vmem [shape: f32[8,5], index: 1, kind: input, shape index: {}]
  %s2 = inlined_call_operand.vmem [shape: f32[16,9], index: 2, kind: input, shape index: {}]
  %s3 = inlined_call_operand.hbm [shape: f32[8,17], index: 3, kind: input, shape index: {}]
  %s4 = inlined_call_operand.vmem [shape: f32[3,9], index: 4, kind: input, shape index: {}]
  %s5 = inlined_call_operand.vmem [shape: f32[3,128], index: 5, kind: output, shape index: {}]
  %s6 = sld [smem:[#allocation0]]
  $region34: #{policy_net_forward.1} parent=0
    _
  %s8 = ssub.s32 1, %s6
  %s9 = scalar_select 0, %s8, %s6
  $region1: #{policy_net_forward.1} parent=0
    #allocation2 [shape = 'u8[4096]{0}', space=vmem, size = 0x1000, scoped, tag = 'input window, operand 3, single buffered']
    #allocation3 [shape = 's32[1]{0}', space=sflag, size = 0x4, scoped, tag = 'scoped memory for policy_net_forward.1']
    %10 = vsyncpa [#allocation3], 0
    // Predicated region
    $region2: #{policy_net_forward.1} parent=1 // pred_check
      _
    $region3: #{policy_net_forward.1} parent=1 // pred_check_branch
      %12 = sbr.rel (0) target = $region5
    $region4: #{policy_net_forward.1} parent=1 // pred_region
      _
    $region5: #{policy_net_forward.1} parent=1 // pred_fallthru
      _
    // Predicated region
    $region6: #{policy_net_forward.1} parent=1 // pred_check
      _
    $region7: #{policy_net_forward.1} parent=1 // pred_check_branch
      %14 = sbr.rel (0) target = $region9
    $region8: #{policy_net_forward.1} parent=1 // pred_region
      _
    $region9: #{policy_net_forward.1} parent=1 // pred_fallthru
      _
    // Predicated region
    $region10: #{policy_net_forward.1} parent=1 // pred_check
      _
    $region11: #{policy_net_forward.1} parent=1 // pred_check_branch
      %16 = sbr.rel (0) target = $region13
    $region12: #{policy_net_forward.1} parent=1 // pred_region
      _
    $region13: #{policy_net_forward.1} parent=1 // pred_fallthru
      _
    // Predicated region
    $region14: #{policy_net_forward.1} parent=1 // pred_check
      _
    $region15: #{policy_net_forward.1} parent=1 // pred_check_branch
      %18 = sbr.rel (0) target = $region17
    $region16: #{policy_net_forward.1} parent=1 // pred_region
      %s20 = ssub.s32 128, 128
      %21 = vsyncadd [#allocation3], %s20
      %s23 = sshll.u32 [#allocation2], 4
      %s24 = int_to_ptr.vmem [resolvable:$true] %s23
      %26 = dma.hbm_to_vmem [thread:$0]  %s3, 128, %s24, [#allocation3]
    $region17: #{policy_net_forward.1} parent=1 // pred_fallthru
      _
    // Predicated region
    $region18: #{policy_net_forward.1} parent=1 // pred_check
      _
    $region19: #{policy_net_forward.1} parent=1 // pred_check_branch
      %28 = sbr.rel (0) target = $region21
    $region20: #{policy_net_forward.1} parent=1 // pred_region
      _
    $region21: #{policy_net_forward.1} parent=1 // pred_fallthru
      _
    // Predicated region
    $region22: #{policy_net_forward.1} parent=1 // pred_check
      _
    $region23: #{policy_net_forward.1} parent=1 // pred_check_branch
      %30 = sbr.rel (0) target = $region25
    $region24: #{policy_net_forward.1} parent=1 // pred_region
      %31 = dma.done [#allocation3], 128
    $region25: #{policy_net_forward.1} parent=1 // pred_fallthru
      _
    %v32 = vld [vmem:[%s0] sm:$0xf]
    %v33 = vld [vmem:[%s1] sm:$0xff]
    %35 = vset.pattern.permute.xlu0 4
    %36 = vperm.xlu0 %35, %v33
    %v37 = vpop.permute.xlu0 %36
    %39 = vset.pattern.permute.xlu0 0
    %40 = vperm.xlu0 %39, %v33
    %v41 = vpop.permute.xlu0 %40
    %v43 = vlaneseq
    %v44 = vshrl.u32 %v43, 7
    %v45 = vsub.s32 0, %v44
    %v46 = vrot.slane %v32, %v45
    %v47 = vmul.f32 %v41, %v46
    %v48 = vadd.f32 %v37, %v47
    %49 = vset.pattern.permute.xlu0 1
    %50 = vperm.xlu0 %49, %v33
    %v51 = vpop.permute.xlu0 %50
    %v53 = vlaneseq
    %v54 = vshrl.u32 %v53, 7
    %v55 = vsub.s32 1, %v54
    %v56 = vrot.slane %v32, %v55
    %v57 = vmul.f32 %v51, %v56
    %v58 = vadd.f32 %v48, %v57
    %59 = vset.pattern.permute.xlu0 2
    %60 = vperm.xlu0 %59, %v33
    %v61 = vpop.permute.xlu0 %60
    %v63 = vlaneseq
    %v64 = vshrl.u32 %v63, 7
    %v65 = vsub.s32 2, %v64
    %v66 = vrot.slane %v32, %v65
    %v67 = vmul.f32 %v61, %v66
    %v68 = vadd.f32 %v58, %v67
    %69 = vset.pattern.permute.xlu0 3
    %70 = vperm.xlu0 %69, %v33
    %v71 = vpop.permute.xlu0 %70
    %v73 = vlaneseq
    %v74 = vshrl.u32 %v73, 7
    %v75 = vsub.s32 3, %v74
    %v76 = vrot.slane %v32, %v75
    %v77 = vmul.f32 %v71, %v76
    %v78 = vadd.f32 %v68, %v77
    %v79 = vmax.f32 %v78, 0.0
    %v80 = vld [vmem:[%s2] sm:$0xff]
    %v81 = vld [vmem:[%s2 + $0x8] sm:$0xff]
    %83 = vset.pattern.permute.xlu0 8
    %84 = vperm.xlu0 %83, %v80
    %v85 = vpop.permute.xlu0 %84
    %88 = vset.pattern.permute.xlu0 8
    %89 = vperm.xlu0 %88, %v81
    %v90 = vpop.permute.xlu0 %89
    %92 = vset.pattern.permute.xlu0 0
    %93 = vperm.xlu0 %92, %v80
    %v94 = vpop.permute.xlu0 %93
    %96 = vset.pattern.permute.xlu0 0
    %97 = vperm.xlu0 %96, %v81
    %v98 = vpop.permute.xlu0 %97
    %v100 = vlaneseq
    %v101 = vshrl.u32 %v100, 7
    %v102 = vsub.s32 0, %v101
    %v103 = vrot.slane %v79, %v102
    %v104 = vmul.f32 %v94, %v103
    %v105 = vmul.f32 %v98, %v103
    %v106 = vadd.f32 %v85, %v104
    %v107 = vadd.f32 %v90, %v105
    %108 = vset.pattern.permute.xlu0 1
    %109 = vperm.xlu0 %108, %v80
    %v110 = vpop.permute.xlu0 %109
    %112 = vset.pattern.permute.xlu0 1
    %113 = vperm.xlu0 %112, %v81
    %v114 = vpop.permute.xlu0 %113
    %v116 = vlaneseq
    %v117 = vshrl.u32 %v116, 7
    %v118 = vsub.s32 1, %v117
    %v119 = vrot.slane %v79, %v118
    %v120 = vmul.f32 %v110, %v119
    %v121 = vmul.f32 %v114, %v119
    %v122 = vadd.f32 %v106, %v120
    %v123 = vadd.f32 %v107, %v121
    %124 = vset.pattern.permute.xlu0 2
    %125 = vperm.xlu0 %124, %v80
    %v126 = vpop.permute.xlu0 %125
    %128 = vset.pattern.permute.xlu0 2
    %129 = vperm.xlu0 %128, %v81
    %v130 = vpop.permute.xlu0 %129
    %v132 = vlaneseq
    %v133 = vshrl.u32 %v132, 7
    %v134 = vsub.s32 2, %v133
    %v135 = vrot.slane %v79, %v134
    %v136 = vmul.f32 %v126, %v135
    %v137 = vmul.f32 %v130, %v135
    %v138 = vadd.f32 %v122, %v136
    %v139 = vadd.f32 %v123, %v137
    %140 = vset.pattern.permute.xlu0 3
    %141 = vperm.xlu0 %140, %v80
    %v142 = vpop.permute.xlu0 %141
    %144 = vset.pattern.permute.xlu0 3
    %145 = vperm.xlu0 %144, %v81
    %v146 = vpop.permute.xlu0 %145
    %v148 = vlaneseq
    %v149 = vshrl.u32 %v148, 7
    %v150 = vsub.s32 3, %v149
    %v151 = vrot.slane %v79, %v150
    %v152 = vmul.f32 %v142, %v151
    %v153 = vmul.f32 %v146, %v151
    %v154 = vadd.f32 %v138, %v152
    %v155 = vadd.f32 %v139, %v153
    %156 = vset.pattern.permute.xlu0 4
    %157 = vperm.xlu0 %156, %v80
    %v158 = vpop.permute.xlu0 %157
    %160 = vset.pattern.permute.xlu0 4
    %161 = vperm.xlu0 %160, %v81
    %v162 = vpop.permute.xlu0 %161
    %v164 = vlaneseq
    %v165 = vshrl.u32 %v164, 7
    %v166 = vsub.s32 4, %v165
    %v167 = vrot.slane %v79, %v166
    %v168 = vmul.f32 %v158, %v167
    %v169 = vmul.f32 %v162, %v167
    %v170 = vadd.f32 %v154, %v168
    %v171 = vadd.f32 %v155, %v169
    %172 = vset.pattern.permute.xlu0 5
    %173 = vperm.xlu0 %172, %v80
    %v174 = vpop.permute.xlu0 %173
    %176 = vset.pattern.permute.xlu0 5
    %177 = vperm.xlu0 %176, %v81
    %v178 = vpop.permute.xlu0 %177
    %v180 = vlaneseq
    %v181 = vshrl.u32 %v180, 7
    %v182 = vsub.s32 5, %v181
    %v183 = vrot.slane %v79, %v182
    %v184 = vmul.f32 %v174, %v183
    %v185 = vmul.f32 %v178, %v183
    %v186 = vadd.f32 %v170, %v184
    %v187 = vadd.f32 %v171, %v185
    %188 = vset.pattern.permute.xlu0 6
    %189 = vperm.xlu0 %188, %v80
    %v190 = vpop.permute.xlu0 %189
    %192 = vset.pattern.permute.xlu0 6
    %193 = vperm.xlu0 %192, %v81
    %v194 = vpop.permute.xlu0 %193
    %v196 = vlaneseq
    %v197 = vshrl.u32 %v196, 7
    %v198 = vsub.s32 6, %v197
    %v199 = vrot.slane %v79, %v198
    %v200 = vmul.f32 %v190, %v199
    %v201 = vmul.f32 %v194, %v199
    %v202 = vadd.f32 %v186, %v200
    %v203 = vadd.f32 %v187, %v201
    %204 = vset.pattern.permute.xlu0 7
    %205 = vperm.xlu0 %204, %v80
    %v206 = vpop.permute.xlu0 %205
    %208 = vset.pattern.permute.xlu0 7
    %209 = vperm.xlu0 %208, %v81
    %v210 = vpop.permute.xlu0 %209
    %v212 = vlaneseq
    %v213 = vshrl.u32 %v212, 7
    %v214 = vsub.s32 7, %v213
    %v215 = vrot.slane %v79, %v214
    %v216 = vmul.f32 %v206, %v215
    %v217 = vmul.f32 %v210, %v215
    %v218 = vadd.f32 %v202, %v216
    %v219 = vadd.f32 %v203, %v217
    %v220 = vmax.f32 %v218, 0.0
    %v221 = vmax.f32 %v219, 0.0
    %v222 = vld [vmem:[#allocation2] sm:$0xff]
    %224 = vset.pattern.permute.xlu0 16
    %225 = vperm.xlu0 %224, %v222
    %v226 = vpop.permute.xlu0 %225
    %228 = vset.pattern.permute.xlu0 0
    %229 = vperm.xlu0 %228, %v222
    %v230 = vpop.permute.xlu0 %229
    %v232 = vlaneseq
    %v233 = vshrl.u32 %v232, 7
    %v234 = vsub.s32 0, %v233
    %v235 = vrot.slane %v220, %v234
    %v236 = vmul.f32 %v230, %v235
    %v237 = vadd.f32 %v226, %v236
    %238 = vset.pattern.permute.xlu0 1
    %239 = vperm.xlu0 %238, %v222
    %v240 = vpop.permute.xlu0 %239
    %v242 = vlaneseq
    %v243 = vshrl.u32 %v242, 7
    %v244 = vsub.s32 1, %v243
    %v245 = vrot.slane %v220, %v244
    %v246 = vmul.f32 %v240, %v245
    %v247 = vadd.f32 %v237, %v246
    %248 = vset.pattern.permute.xlu0 2
    %249 = vperm.xlu0 %248, %v222
    %v250 = vpop.permute.xlu0 %249
    %v252 = vlaneseq
    %v253 = vshrl.u32 %v252, 7
    %v254 = vsub.s32 2, %v253
    %v255 = vrot.slane %v220, %v254
    %v256 = vmul.f32 %v250, %v255
    %v257 = vadd.f32 %v247, %v256
    %258 = vset.pattern.permute.xlu0 3
    %259 = vperm.xlu0 %258, %v222
    %v260 = vpop.permute.xlu0 %259
    %v262 = vlaneseq
    %v263 = vshrl.u32 %v262, 7
    %v264 = vsub.s32 3, %v263
    %v265 = vrot.slane %v220, %v264
    %v266 = vmul.f32 %v260, %v265
    %v267 = vadd.f32 %v257, %v266
    %268 = vset.pattern.permute.xlu0 4
    %269 = vperm.xlu0 %268, %v222
    %v270 = vpop.permute.xlu0 %269
    %v272 = vlaneseq
    %v273 = vshrl.u32 %v272, 7
    %v274 = vsub.s32 4, %v273
    %v275 = vrot.slane %v220, %v274
    %v276 = vmul.f32 %v270, %v275
    %v277 = vadd.f32 %v267, %v276
    %278 = vset.pattern.permute.xlu0 5
    %279 = vperm.xlu0 %278, %v222
    %v280 = vpop.permute.xlu0 %279
    %v282 = vlaneseq
    %v283 = vshrl.u32 %v282, 7
    %v284 = vsub.s32 5, %v283
    %v285 = vrot.slane %v220, %v284
    %v286 = vmul.f32 %v280, %v285
    %v287 = vadd.f32 %v277, %v286
    %288 = vset.pattern.permute.xlu0 6
    %289 = vperm.xlu0 %288, %v222
    %v290 = vpop.permute.xlu0 %289
    %v292 = vlaneseq
    %v293 = vshrl.u32 %v292, 7
    %v294 = vsub.s32 6, %v293
    %v295 = vrot.slane %v220, %v294
    %v296 = vmul.f32 %v290, %v295
    %v297 = vadd.f32 %v287, %v296
    %298 = vset.pattern.permute.xlu0 7
    %299 = vperm.xlu0 %298, %v222
    %v300 = vpop.permute.xlu0 %299
    %v302 = vlaneseq
    %v303 = vshrl.u32 %v302, 7
    %v304 = vsub.s32 7, %v303
    %v305 = vrot.slane %v220, %v304
    %v306 = vmul.f32 %v300, %v305
    %v307 = vadd.f32 %v297, %v306
    %308 = vset.pattern.permute.xlu0 8
    %309 = vperm.xlu0 %308, %v222
    %v310 = vpop.permute.xlu0 %309
    %v312 = vlaneseq
    %v313 = vshrl.u32 %v312, 7
    %v314 = vsub.s32 0, %v313
    %v315 = vrot.slane %v221, %v314
    %v316 = vmul.f32 %v310, %v315
    %v317 = vadd.f32 %v307, %v316
    %318 = vset.pattern.permute.xlu0 9
    %319 = vperm.xlu0 %318, %v222
    %v320 = vpop.permute.xlu0 %319
    %v322 = vlaneseq
    %v323 = vshrl.u32 %v322, 7
    %v324 = vsub.s32 1, %v323
    %v325 = vrot.slane %v221, %v324
    %v326 = vmul.f32 %v320, %v325
    %v327 = vadd.f32 %v317, %v326
    %328 = vset.pattern.permute.xlu0 10
    %329 = vperm.xlu0 %328, %v222
    %v330 = vpop.permute.xlu0 %329
    %v332 = vlaneseq
    %v333 = vshrl.u32 %v332, 7
    %v334 = vsub.s32 2, %v333
    %v335 = vrot.slane %v221, %v334
    %v336 = vmul.f32 %v330, %v335
    %v337 = vadd.f32 %v327, %v336
    %338 = vset.pattern.permute.xlu0 11
    %339 = vperm.xlu0 %338, %v222
    %v340 = vpop.permute.xlu0 %339
    %v342 = vlaneseq
    %v343 = vshrl.u32 %v342, 7
    %v344 = vsub.s32 3, %v343
    %v345 = vrot.slane %v221, %v344
    %v346 = vmul.f32 %v340, %v345
    %v347 = vadd.f32 %v337, %v346
    %348 = vset.pattern.permute.xlu0 12
    %349 = vperm.xlu0 %348, %v222
    %v350 = vpop.permute.xlu0 %349
    %v352 = vlaneseq
    %v353 = vshrl.u32 %v352, 7
    %v354 = vsub.s32 4, %v353
    %v355 = vrot.slane %v221, %v354
    %v356 = vmul.f32 %v350, %v355
    %v357 = vadd.f32 %v347, %v356
    %358 = vset.pattern.permute.xlu0 13
    %359 = vperm.xlu0 %358, %v222
    %v360 = vpop.permute.xlu0 %359
    %v362 = vlaneseq
    %v363 = vshrl.u32 %v362, 7
    %v364 = vsub.s32 5, %v363
    %v365 = vrot.slane %v221, %v364
    %v366 = vmul.f32 %v360, %v365
    %v367 = vadd.f32 %v357, %v366
    %368 = vset.pattern.permute.xlu0 14
    %369 = vperm.xlu0 %368, %v222
    %v370 = vpop.permute.xlu0 %369
    %v372 = vlaneseq
    %v373 = vshrl.u32 %v372, 7
    %v374 = vsub.s32 6, %v373
    %v375 = vrot.slane %v221, %v374
    %v376 = vmul.f32 %v370, %v375
    %v377 = vadd.f32 %v367, %v376
    %378 = vset.pattern.permute.xlu0 15
    %379 = vperm.xlu0 %378, %v222
    %v380 = vpop.permute.xlu0 %379
    %v382 = vlaneseq
    %v383 = vshrl.u32 %v382, 7
    %v384 = vsub.s32 7, %v383
    %v385 = vrot.slane %v221, %v384
    %v386 = vmul.f32 %v380, %v385
    %v387 = vadd.f32 %v377, %v386
    %v388 = vmax.f32 %v387, 0.0
    %v389 = vld [vmem:[%s4] sm:$0x7]
    %391 = vset.pattern.permute.xlu0 8
    %392 = vperm.xlu0 %391, %v389
    %v393 = vpop.permute.xlu0 %392
    %395 = vset.pattern.permute.xlu0 0
    %396 = vperm.xlu0 %395, %v389
    %v397 = vpop.permute.xlu0 %396
    %v399 = vlaneseq
    %v400 = vshrl.u32 %v399, 7
    %v401 = vsub.s32 0, %v400
    %v402 = vrot.slane %v388, %v401
    %v403 = vmul.f32 %v397, %v402
    %v404 = vadd.f32 %v393, %v403
    %405 = vset.pattern.permute.xlu0 1
    %406 = vperm.xlu0 %405, %v389
    %v407 = vpop.permute.xlu0 %406
    %v409 = vlaneseq
    %v410 = vshrl.u32 %v409, 7
    %v411 = vsub.s32 1, %v410
    %v412 = vrot.slane %v388, %v411
    %v413 = vmul.f32 %v407, %v412
    %v414 = vadd.f32 %v404, %v413
    %415 = vset.pattern.permute.xlu0 2
    %416 = vperm.xlu0 %415, %v389
    %v417 = vpop.permute.xlu0 %416
    %v419 = vlaneseq
    %v420 = vshrl.u32 %v419, 7
    %v421 = vsub.s32 2, %v420
    %v422 = vrot.slane %v388, %v421
    %v423 = vmul.f32 %v417, %v422
    %v424 = vadd.f32 %v414, %v423
    %425 = vset.pattern.permute.xlu0 3
    %426 = vperm.xlu0 %425, %v389
    %v427 = vpop.permute.xlu0 %426
    %v429 = vlaneseq
    %v430 = vshrl.u32 %v429, 7
    %v431 = vsub.s32 3, %v430
    %v432 = vrot.slane %v388, %v431
    %v433 = vmul.f32 %v427, %v432
    %v434 = vadd.f32 %v424, %v433
    %435 = vset.pattern.permute.xlu0 4
    %436 = vperm.xlu0 %435, %v389
    %v437 = vpop.permute.xlu0 %436
    %v439 = vlaneseq
    %v440 = vshrl.u32 %v439, 7
    %v441 = vsub.s32 4, %v440
    %v442 = vrot.slane %v388, %v441
    %v443 = vmul.f32 %v437, %v442
    %v444 = vadd.f32 %v434, %v443
    %445 = vset.pattern.permute.xlu0 5
    %446 = vperm.xlu0 %445, %v389
    %v447 = vpop.permute.xlu0 %446
    %v449 = vlaneseq
    %v450 = vshrl.u32 %v449, 7
    %v451 = vsub.s32 5, %v450
    %v452 = vrot.slane %v388, %v451
    %v453 = vmul.f32 %v447, %v452
    %v454 = vadd.f32 %v444, %v453
    %455 = vset.pattern.permute.xlu0 6
    %456 = vperm.xlu0 %455, %v389
    %v457 = vpop.permute.xlu0 %456
    %v459 = vlaneseq
    %v460 = vshrl.u32 %v459, 7
    %v461 = vsub.s32 6, %v460
    %v462 = vrot.slane %v388, %v461
    %v463 = vmul.f32 %v457, %v462
    %v464 = vadd.f32 %v454, %v463
    %465 = vset.pattern.permute.xlu0 7
    %466 = vperm.xlu0 %465, %v389
    %v467 = vpop.permute.xlu0 %466
    %v469 = vlaneseq
    %v470 = vshrl.u32 %v469, 7
    %v471 = vsub.s32 7, %v470
    %v472 = vrot.slane %v388, %v471
    %v473 = vmul.f32 %v467, %v472
    %v474 = vadd.f32 %v464, %v473
    %475 = vst [vmem:[%s5] sm:$0x7] %v474
    // Predicated region
    $region26: #{policy_net_forward.1} parent=1 // pred_check
      _
    $region27: #{policy_net_forward.1} parent=1 // pred_check_branch
      %477 = sbr.rel (0) target = $region29
    $region28: #{policy_net_forward.1} parent=1 // pred_region
      _
    $region29: #{policy_net_forward.1} parent=1 // pred_fallthru
      _
    // Predicated region
    $region30: #{policy_net_forward.1} parent=1 // pred_check
      _
    $region31: #{policy_net_forward.1} parent=1 // pred_check_branch
      %479 = sbr.rel (0) target = $region33
    $region32: #{policy_net_forward.1} parent=1 // pred_region
      _
    $region33: #{policy_net_forward.1} parent=1 // pred_fallthru
      _
    %480 = vsyncpa [#allocation3], 1

</llo_original>
